<compile_context>
chip_gen: v6e
topology: v6e:2x2x1
jax: 0.10.0
libtpu: 0.0.40
codegen_flags: <defaults>
</compile_context>

<pallas_src>
import jax
import jax.numpy as jnp
from jax.experimental import pallas as pl
from jax.experimental.pallas import tpu as pltpu


# ------------------------------------------------------------------------
# Logical and lane-padded feature widths of each stage.
# ------------------------------------------------------------------------
_F_IN = 9 * 3 * 3      # 81   conv1 input  (flattened NCHW) -- NOT padded
_F_C1 = 16 * 3 * 3     # 144  conv1 output
_F_C2 = 32 * 3 * 3     # 288  conv2 output
_F_FC1 = 64            # fc1 output
_F_FC2 = 1             # fc2 output

N1 = 256               # 144 -> 256
N2 = 384               # 288 -> 384
N3 = 128               # 64  -> 128
N4 = 128               # 1   -> 128 (lane-dense output slab)


def _round_up(x, m):
    return (x + m - 1) // m * m


# ------------------------------------------------------------------------
# Pallas kernel: all four layers fused, weights resident in VMEM.
#   out = relu(relu(relu(x@W1+b1)@W2+b2)@W3+b3)@W4 + b4
# Matmuls run on the MXU in bf16 with f32 accumulation; bias/ReLU in f32.
# ------------------------------------------------------------------------
def _fused_mlp_kernel(x_ref, w1_ref, b1_ref, w2_ref, b2_ref,
                      w3_ref, b3_ref, w4_ref, b4_ref, o_ref):
    h = x_ref[...].astype(jnp.bfloat16)                              # (TM, 81)
    h = jnp.dot(h, w1_ref[...],
                preferred_element_type=jnp.float32) + b1_ref[...]    # (TM, N1) f32
    h = jnp.maximum(h, 0.0).astype(jnp.bfloat16)
    h = jnp.dot(h, w2_ref[...],
                preferred_element_type=jnp.float32) + b2_ref[...]    # (TM, N2) f32
    h = jnp.maximum(h, 0.0).astype(jnp.bfloat16)
    h = jnp.dot(h, w3_ref[...],
                preferred_element_type=jnp.float32) + b3_ref[...]    # (TM, N3) f32
    h = jnp.maximum(h, 0.0).astype(jnp.bfloat16)
    o = jnp.dot(h, w4_ref[...],
                preferred_element_type=jnp.float32) + b4_ref[...]    # (TM, N4) f32
    o_ref[...] = o.astype(o_ref.dtype)                               # bf16 store


def _choose_tile_m(rows, tile_m_max):
    """rows is a multiple of 8.  Pick a batch tile that (a) fits VMEM easily,
    (b) gives an even number of grid steps for large batches (1:1 megacore
    split on v7x's two TensorCores; harmless on single-TC v5e/v6e)."""
    if rows <= tile_m_max:
        return rows
    steps = pl.cdiv(rows, tile_m_max)
    if steps % 2:
        steps += 1
    return _round_up(pl.cdiv(rows, steps), 8)


def _fused_forward_call(x_flat, kp, tile_m):
    """x_flat: (rows, 81) f32, rows % 8 == 0.  Returns (rows, N4) bf16."""
    rows = x_flat.shape[0]
    grid = (pl.cdiv(rows, tile_m),)   # ragged last block handled by Pallas

    flops = 2 * rows * (_F_IN * N1 + N1 * N2 + N2 * N3 + N3 * N4)
    weight_bytes = 2 * (_F_IN * N1 + N1 * N2 + N2 * N3 + N3 * N4) \
        + 4 * (N1 + N2 + N3 + N4)
    bytes_accessed = 4 * rows * _F_IN + 2 * rows * N4 + weight_bytes

    return pl.pallas_call(
        _fused_mlp_kernel,
        out_shape=jax.ShapeDtypeStruct((rows, N4), jnp.bfloat16),
        grid=grid,
        in_specs=[
            # batch-tiled input, raw 81-wide f32 (no host lane pad)
            pl.BlockSpec((tile_m, _F_IN), lambda i: (i, 0)),
            # resident weights/biases (constant index_map)
            pl.BlockSpec((_F_IN, N1), lambda i: (0, 0)),
            pl.BlockSpec((1, N1), lambda i: (0, 0)),
            pl.BlockSpec((N1, N2), lambda i: (0, 0)),
            pl.BlockSpec((1, N2), lambda i: (0, 0)),
            pl.BlockSpec((N2, N3), lambda i: (0, 0)),
            pl.BlockSpec((1, N3), lambda i: (0, 0)),
            pl.BlockSpec((N3, N4), lambda i: (0, 0)),
            pl.BlockSpec((1, N4), lambda i: (0, 0)),
        ],
        out_specs=pl.BlockSpec((tile_m, N4), lambda i: (i, 0)),
        compiler_params=pltpu.CompilerParams(
            dimension_semantics=("parallel",),
            vmem_limit_bytes=32 * 1024 * 1024),
        cost_estimate=pl.CostEstimate(
            flops=flops, transcendentals=0, bytes_accessed=bytes_accessed),
    )(x_flat, kp["w1"], kp["b1"], kp["w2"], kp["b2"],
      kp["w3"], kp["b3"], kp["w4"], kp["b4"])


# ------------------------------------------------------------------------
# One-time parameter folding (init time, not in the hot path).
# ------------------------------------------------------------------------
def _conv3x3_same_as_dense(w):
    """Exactly fold a 3x3 / pad-1 / stride-1 conv on a 3x3 spatial grid into a
    dense matrix M (Cin*9, Cout*9) such that out_flat = in_flat @ M, with both
    activations flattened in PyTorch NCHW (c, h, w) order."""
    cin = w.shape[1]
    cout = w.shape[0]
    idx = jnp.arange(3)
    # kernel offset kh = ih - oh + 1, valid iff 0 <= kh <= 2 (zero padding).
    kh = idx[:, None] - idx[None, :] + 1          # (ih, oh)
    valid = (kh >= 0) & (kh <= 2)
    khc = jnp.clip(kh, 0, 2)

    wt = jnp.transpose(w, (1, 0, 2, 3))           # (cin, cout, kh, kw)
    # g[ci, co, ih, oh, iw, ow] = w[co, ci, kh(ih,oh), kw(iw,ow)]
    g = wt[:, :, khc[:, :, None, None], khc[None, None, :, :]]
    mask = (valid[:, :, None, None] & valid[None, None, :, :]).astype(w.dtype)
    g = g * mask
    # -> (ci, ih, iw, co, oh, ow), then flatten rows/cols in NCHW order.
    g = jnp.transpose(g, (0, 2, 4, 1, 3, 5))
    return g.reshape(cin * 9, cout * 9)


def _pad2d(m, rows, cols):
    r, c = m.shape
    return jnp.pad(m, ((0, rows - r), (0, cols - c)))


def _pad_bias(b, cols):
    return jnp.pad(b, (0, cols - b.shape[0])).reshape(1, cols)


def fold_params(params):
    """Fold convs into dense matmuls and lane-pad (f32, done once)."""
    w1 = _conv3x3_same_as_dense(params["conv1_w"])     # (81, 144)
    b1 = jnp.repeat(params["conv1_b"], 9)              # (144,)
    w2 = _conv3x3_same_as_dense(params["conv2_w"])     # (144, 288)
    b2 = jnp.repeat(params["conv2_b"], 9)              # (288,)
    w3 = params["fc1_w"].T                             # (288, 64)
    b3 = params["fc1_b"]
    w4 = params["fc2_w"].T                             # (64, 1)
    b4 = params["fc2_b"]
    return {
        "w1": _pad2d(w1, _F_IN, N1), "b1": _pad_bias(b1, N1),
        "w2": _pad2d(w2, N1, N2),    "b2": _pad_bias(b2, N2),
        "w3": _pad2d(w3, N2, N3),    "b3": _pad_bias(b3, N3),
        "w4": _pad2d(w4, N3, N4),    "b4": _pad_bias(b4, N4),
    }


def cast_for_kernel(folded):
    """Weights -> bf16 (MXU operands); biases stay f32 (added post-accum)."""
    return {k: (v.astype(jnp.bfloat16) if k.startswith("w") else v)
            for k, v in folded.items()}


# ------------------------------------------------------------------------
# Parameters (deterministic init, mimics the module's shapes)
# ------------------------------------------------------------------------
def init_params(key):
    ks = jax.random.split(key, 8)
    scale = 0.1
    return {
        "conv1_w": scale * jax.random.normal(ks[0], (16, 9, 3, 3), jnp.float32),
        "conv1_b": scale * jax.random.normal(ks[1], (16,), jnp.float32),
        "conv2_w": scale * jax.random.normal(ks[2], (32, 16, 3, 3), jnp.float32),
        "conv2_b": scale * jax.random.normal(ks[3], (32,), jnp.float32),
        "fc1_w": scale * jax.random.normal(ks[4], (64, 32 * 3 * 3), jnp.float32),
        "fc1_b": scale * jax.random.normal(ks[5], (64,), jnp.float32),
        "fc2_w": scale * jax.random.normal(ks[6], (1, 64), jnp.float32),
        "fc2_b": scale * jax.random.normal(ks[7], (1,), jnp.float32),
    }


# ------------------------------------------------------------------------
# Full forward pass (hot path = reshape + optional 8-row pad + one fused
# pallas_call + slice/cast)
# ------------------------------------------------------------------------
def timeseries_cnn_forward(kparams, x, *, tile_m_max=1024):
    """x: (B, 9, 3, 3) NCHW float32 -> (B, 1) float32."""
    batch = x.shape[0]
    x_flat = x.reshape(batch, _F_IN)          # NCHW flatten == view
    rows = _round_up(batch, 8)
    if rows != batch:
        x_flat = jnp.pad(x_flat, ((0, rows - batch), (0, 0)))
    tile_m = _choose_tile_m(rows, tile_m_max)
    out = _fused_forward_call(x_flat, kparams, tile_m)   # (rows, N4) bf16
    return out[:batch, :_F_FC2].astype(jnp.float32)


# ------------------------------------------------------------------------
# Pure-JAX references (for self-checking only)
# ------------------------------------------------------------------------
def timeseries_cnn_reference(params, x):
    """Exact f32 conv-based reference (module semantics)."""
    hi = jax.lax.Precision.HIGHEST
    dn = ("NCHW", "OIHW", "NCHW")
    h = jax.lax.conv_general_dilated(
        x, params["conv1_w"], (1, 1), ((1, 1), (1, 1)),
        dimension_numbers=dn, precision=hi)
    h = jnp.maximum(h + params["conv1_b"][None, :, None, None], 0.0)
    h = jax.lax.conv_general_dilated(
        h, params["conv2_w"], (1, 1), ((1, 1), (1, 1)),
        dimension_numbers=dn, precision=hi)
    h = jnp.maximum(h + params["conv2_b"][None, :, None, None], 0.0)
    h = h.reshape(x.shape[0], -1)
    h = jnp.maximum(jnp.dot(h, params["fc1_w"].T, precision=hi)
                    + params["fc1_b"], 0.0)
    return jnp.dot(h, params["fc2_w"].T, precision=hi) + params["fc2_b"]


def folded_forward_ref(folded, x, compute_dtype=jnp.float32):
    """Pure-JAX emulation of the fused kernel math (fold + padded matmuls)."""
    hi = jax.lax.Precision.HIGHEST
    h = x.reshape(x.shape[0], _F_IN).astype(compute_dtype)
    layers = (("w1", "b1", True), ("w2", "b2", True),
              ("w3", "b3", True), ("w4", "b4", False))
    for wn, bn, relu in layers:
        w = folded[wn].astype(compute_dtype)
        h = jnp.dot(h, w, preferred_element_type=jnp.float32,
                    precision=hi) + folded[bn].astype(jnp.float32)
        if relu:
            h = jnp.maximum(h, 0.0).astype(compute_dtype)
    return h[:, :_F_FC2]


if __name__ == "__main__":
    key = jax.random.PRNGKey(0)
    pkey, xkey, xkey2 = jax.random.split(key, 3)
    params = init_params(pkey)
    folded = fold_params(params)         # f32 folded+padded (validation)
    kparams = cast_for_kernel(folded)    # bf16 weights / f32 biases (kernel)

    fwd = jax.jit(timeseries_cnn_forward)

    # Small deterministic input consistent with the module: (B=2, C=9, H=3, W=3)
    x = jax.random.normal(xkey, (2, 9, 3, 3), jnp.float32)
    y = jax.block_until_ready(fwd(kparams, x))
    assert y.shape == (2, 1), y.shape
    assert y.dtype == jnp.float32, y.dtype
    assert bool(jnp.all(jnp.isfinite(y))), "non-finite output"

    y_conv = timeseries_cnn_reference(params, x)

    # (a) Tight check of the conv->dense fold itself (exact f32 math).
    y_fold_f32 = folded_forward_ref(folded, x, jnp.float32)
    assert bool(jnp.allclose(y_fold_f32, y_conv, rtol=1e-4, atol=1e-4)), (
        "fold mismatch", float(jnp.max(jnp.abs(y_fold_f32 - y_conv))))

    # (b) Tight check of the kernel against a bf16 emulation of the same math.
    y_bf_ref = folded_forward_ref(folded, x, jnp.bfloat16)
    y_bf_ref = y_bf_ref.astype(jnp.bfloat16).astype(jnp.float32)
    assert bool(jnp.allclose(y, y_bf_ref, rtol=5e-3, atol=5e-3)), (
        "kernel vs bf16 emulation", float(jnp.max(jnp.abs(y - y_bf_ref))))

    # (c) End-to-end bound vs the exact f32 reference (bf16 error budget only;
    #     structural correctness is covered tightly by (a)+(b)).
    assert bool(jnp.allclose(y, y_conv, rtol=5e-2, atol=5e-2)), (
        float(jnp.max(jnp.abs(y - y_conv))))

    # Larger batch exercises the multi-step batch grid: rows=1304, tile_m=656,
    # grid=(2,) (even -> 1:1 split on v7x megacore), ragged last block,
    # weights resident in VMEM across grid steps.
    x_big = jax.random.normal(xkey2, (1300, 9, 3, 3), jnp.float32)
    y_big = jax.block_until_ready(fwd(kparams, x_big))
    assert y_big.shape == (1300, 1), y_big.shape
    assert bool(jnp.all(jnp.isfinite(y_big))), "non-finite output"
    y_big_conv = timeseries_cnn_reference(params, x_big)
    y_big_bf_ref = folded_forward_ref(folded, x_big, jnp.bfloat16)
    y_big_bf_ref = y_big_bf_ref.astype(jnp.bfloat16).astype(jnp.float32)
    assert bool(jnp.allclose(y_big, y_big_bf_ref, rtol=5e-3, atol=5e-3)), (
        "kernel vs bf16 emulation (big)",
        float(jnp.max(jnp.abs(y_big - y_big_bf_ref))))
    assert bool(jnp.allclose(y_big, y_big_conv, rtol=5e-2, atol=5e-2)), (
        float(jnp.max(jnp.abs(y_big - y_big_conv))))

    print("KERNEL_OK")
</pallas_src>

<mosaic_0001>
module attributes {stable_mosaic.version = 11 : i64} {
  func.func @_fused_mlp_kernel(%arg0: i32, %arg1: memref<8x81xf32, #tpu.memory_space<vmem>>, %arg2: memref<81x256xbf16, #tpu.memory_space<vmem>>, %arg3: memref<1x256xf32, #tpu.memory_space<vmem>>, %arg4: memref<256x384xbf16, #tpu.memory_space<vmem>>, %arg5: memref<1x384xf32, #tpu.memory_space<vmem>>, %arg6: memref<384x128xbf16, #tpu.memory_space<vmem>>, %arg7: memref<1x128xf32, #tpu.memory_space<vmem>>, %arg8: memref<128x128xbf16, #tpu.memory_space<vmem>>, %arg9: memref<1x128xf32, #tpu.memory_space<vmem>>, %arg10: memref<8x128xbf16, #tpu.memory_space<vmem>>) attributes {dimension_semantics = [#tpu.dimension_semantics<parallel>], iteration_bounds = array<i64: 1>, scalar_prefetch = 0 : i64, scratch_operands = 0 : i64, tpu.core_type = #tpu.core_type<tc>, window_params = [{transform_indices = @transform_0, window_bounds = array<i64: 8, 81>}, {pipeline_mode = #tpu.pipeline_mode<synchronous>, transform_indices = @transform_1, window_bounds = array<i64: 81, 256>}, {pipeline_mode = #tpu.pipeline_mode<synchronous>, transform_indices = @transform_2, window_bounds = array<i64: 1, 256>}, {pipeline_mode = #tpu.pipeline_mode<synchronous>, transform_indices = @transform_3, window_bounds = array<i64: 256, 384>}, {pipeline_mode = #tpu.pipeline_mode<synchronous>, transform_indices = @transform_4, window_bounds = array<i64: 1, 384>}, {pipeline_mode = #tpu.pipeline_mode<synchronous>, transform_indices = @transform_5, window_bounds = array<i64: 384, 128>}, {pipeline_mode = #tpu.pipeline_mode<synchronous>, transform_indices = @transform_6, window_bounds = array<i64: 1, 128>}, {pipeline_mode = #tpu.pipeline_mode<synchronous>, transform_indices = @transform_7, window_bounds = array<i64: 128, 128>}, {pipeline_mode = #tpu.pipeline_mode<synchronous>, transform_indices = @transform_8, window_bounds = array<i64: 1, 128>}, {transform_indices = @transform_9, window_bounds = array<i64: 8, 128>}]} {
    %c0 = arith.constant 0 : index
    %c0_0 = arith.constant 0 : index
    %0 = vector.load %arg1[%c0, %c0_0] : memref<8x81xf32, #tpu.memory_space<vmem>>, vector<8x81xf32>
    %1 = arith.truncf %0 : vector<8x81xf32> to vector<8x81xbf16>
    %c0_1 = arith.constant 0 : index
    %c0_2 = arith.constant 0 : index
    %2 = vector.load %arg2[%c0_1, %c0_2] : memref<81x256xbf16, #tpu.memory_space<vmem>>, vector<81x256xbf16>
    %cst = arith.constant dense<0.000000e+00> : vector<8x256xf32>
    %3 = tpu.matmul %1, %2, %cst {dimension_numbers = #tpu.dot_dimension_numbers<[1], [0], [0], [1], [0, 0, 1, 1], [], []>} : vector<8x81xbf16>, vector<81x256xbf16>, vector<8x256xf32> -> vector<8x256xf32>
    %c0_3 = arith.constant 0 : index
    %c0_4 = arith.constant 0 : index
    %4 = vector.load %arg3[%c0_3, %c0_4] : memref<1x256xf32, #tpu.memory_space<vmem>>, vector<1x256xf32>
    %5 = vector.broadcast %4 : vector<1x256xf32> to vector<8x256xf32>
    %6 = arith.addf %3, %5 : vector<8x256xf32>
    %cst_5 = arith.constant 0.000000e+00 : f32
    %7 = vector.broadcast %cst_5 : f32 to vector<8x256xf32>
    %8 = arith.maximumf %6, %7 : vector<8x256xf32>
    %9 = arith.truncf %8 : vector<8x256xf32> to vector<8x256xbf16>
    %c0_6 = arith.constant 0 : index
    %c0_7 = arith.constant 0 : index
    %10 = vector.load %arg4[%c0_6, %c0_7] : memref<256x384xbf16, #tpu.memory_space<vmem>>, vector<256x384xbf16>
    %cst_8 = arith.constant dense<0.000000e+00> : vector<8x384xf32>
    %11 = tpu.matmul %9, %10, %cst_8 {dimension_numbers = #tpu.dot_dimension_numbers<[1], [0], [0], [1], [0, 0, 1, 1], [], []>} : vector<8x256xbf16>, vector<256x384xbf16>, vector<8x384xf32> -> vector<8x384xf32>
    %c0_9 = arith.constant 0 : index
    %c0_10 = arith.constant 0 : index
    %12 = vector.load %arg5[%c0_9, %c0_10] : memref<1x384xf32, #tpu.memory_space<vmem>>, vector<1x384xf32>
    %13 = vector.broadcast %12 : vector<1x384xf32> to vector<8x384xf32>
    %14 = arith.addf %11, %13 : vector<8x384xf32>
    %cst_11 = arith.constant 0.000000e+00 : f32
    %15 = vector.broadcast %cst_11 : f32 to vector<8x384xf32>
    %16 = arith.maximumf %14, %15 : vector<8x384xf32>
    %17 = arith.truncf %16 : vector<8x384xf32> to vector<8x384xbf16>
    %c0_12 = arith.constant 0 : index
    %c0_13 = arith.constant 0 : index
    %18 = vector.load %arg6[%c0_12, %c0_13] : memref<384x128xbf16, #tpu.memory_space<vmem>>, vector<384x128xbf16>
    %cst_14 = arith.constant dense<0.000000e+00> : vector<8x128xf32>
    %19 = tpu.matmul %17, %18, %cst_14 {dimension_numbers = #tpu.dot_dimension_numbers<[1], [0], [0], [1], [0, 0, 1, 1], [], []>} : vector<8x384xbf16>, vector<384x128xbf16>, vector<8x128xf32> -> vector<8x128xf32>
    %c0_15 = arith.constant 0 : index
    %c0_16 = arith.constant 0 : index
    %20 = vector.load %arg7[%c0_15, %c0_16] : memref<1x128xf32, #tpu.memory_space<vmem>>, vector<1x128xf32>
    %21 = vector.broadcast %20 : vector<1x128xf32> to vector<8x128xf32>
    %22 = arith.addf %19, %21 : vector<8x128xf32>
    %cst_17 = arith.constant 0.000000e+00 : f32
    %23 = vector.broadcast %cst_17 : f32 to vector<8x128xf32>
    %24 = arith.maximumf %22, %23 : vector<8x128xf32>
    %25 = arith.truncf %24 : vector<8x128xf32> to vector<8x128xbf16>
    %c0_18 = arith.constant 0 : index
    %c0_19 = arith.constant 0 : index
    %26 = vector.load %arg8[%c0_18, %c0_19] : memref<128x128xbf16, #tpu.memory_space<vmem>>, vector<128x128xbf16>
    %cst_20 = arith.constant dense<0.000000e+00> : vector<8x128xf32>
    %27 = tpu.matmul %25, %26, %cst_20 {dimension_numbers = #tpu.dot_dimension_numbers<[1], [0], [0], [1], [0, 0, 1, 1], [], []>} : vector<8x128xbf16>, vector<128x128xbf16>, vector<8x128xf32> -> vector<8x128xf32>
    %c0_21 = arith.constant 0 : index
    %c0_22 = arith.constant 0 : index
    %28 = vector.load %arg9[%c0_21, %c0_22] : memref<1x128xf32, #tpu.memory_space<vmem>>, vector<1x128xf32>
    %29 = vector.broadcast %28 : vector<1x128xf32> to vector<8x128xf32>
    %30 = arith.addf %27, %29 : vector<8x128xf32>
    %31 = arith.truncf %30 : vector<8x128xf32> to vector<8x128xbf16>
    %c0_23 = arith.constant 0 : index
    %c0_24 = arith.constant 0 : index
    %32 = vector.load %arg10[%c0_23, %c0_24] : memref<8x128xbf16, #tpu.memory_space<vmem>>, vector<8x128xbf16>
    tpu.vector_store %arg10[%c0_23, %c0_24], %31 {strides = array<i32>} : memref<8x128xbf16, #tpu.memory_space<vmem>>, vector<8x128xbf16>,
    return
  }
  func.func @transform_0(%arg0: i32) -> (i32, i32) {
    %c0_i32 = arith.constant 0 : i32
    %c0_i32_0 = arith.constant 0 : i32
    return %arg0, %c0_i32 : i32, i32
  }
  func.func @transform_1(%arg0: i32) -> (i32, i32) {
    %c0_i32 = arith.constant 0 : i32
    %c0_i32_0 = arith.constant 0 : i32
    %c0_i32_1 = arith.constant 0 : i32
    return %c0_i32, %c0_i32_0 : i32, i32
  }
  func.func @transform_2(%arg0: i32) -> (i32, i32) {
    %c0_i32 = arith.constant 0 : i32
    %c0_i32_0 = arith.constant 0 : i32
    %c0_i32_1 = arith.constant 0 : i32
    return %c0_i32, %c0_i32_0 : i32, i32
  }
  func.func @transform_3(%arg0: i32) -> (i32, i32) {
    %c0_i32 = arith.constant 0 : i32
    %c0_i32_0 = arith.constant 0 : i32
    %c0_i32_1 = arith.constant 0 : i32
    return %c0_i32, %c0_i32_0 : i32, i32
  }
  func.func @transform_4(%arg0: i32) -> (i32, i32) {
    %c0_i32 = arith.constant 0 : i32
    %c0_i32_0 = arith.constant 0 : i32
    %c0_i32_1 = arith.constant 0 : i32
    return %c0_i32, %c0_i32_0 : i32, i32
  }
  func.func @transform_5(%arg0: i32) -> (i32, i32) {
    %c0_i32 = arith.constant 0 : i32
    %c0_i32_0 = arith.constant 0 : i32
    %c0_i32_1 = arith.constant 0 : i32
    return %c0_i32, %c0_i32_0 : i32, i32
  }
  func.func @transform_6(%arg0: i32) -> (i32, i32) {
    %c0_i32 = arith.constant 0 : i32
    %c0_i32_0 = arith.constant 0 : i32
    %c0_i32_1 = arith.constant 0 : i32
    return %c0_i32, %c0_i32_0 : i32, i32
  }
  func.func @transform_7(%arg0: i32) -> (i32, i32) {
    %c0_i32 = arith.constant 0 : i32
    %c0_i32_0 = arith.constant 0 : i32
    %c0_i32_1 = arith.constant 0 : i32
    return %c0_i32, %c0_i32_0 : i32, i32
  }
  func.func @transform_8(%arg0: i32) -> (i32, i32) {
    %c0_i32 = arith.constant 0 : i32
    %c0_i32_0 = arith.constant 0 : i32
    %c0_i32_1 = arith.constant 0 : i32
    return %c0_i32, %c0_i32_0 : i32, i32
  }
  func.func @transform_9(%arg0: i32) -> (i32, i32) {
    %c0_i32 = arith.constant 0 : i32
    %c0_i32_0 = arith.constant 0 : i32
    return %arg0, %c0_i32 : i32, i32
  }
}

</mosaic_0001>

<llo_original>
// kernel: timeseries_cnn_forward.1
$region0: #{timeseries_cnn_forward.1}
  #allocation0 [shape = 'u32[]', space=smem, size = 0x4, offset = 0x4, fixed_abs, tag = 'smem constant byte address 0x4 - core index']
  #allocation1 [shape = 'u32[144,128]{1,0:T(1,128)}', space=vmem, size = 0x12000, scoped, tag = 'internal scratch']
  %s0 = inlined_call_operand.vmem [shape: f32[8,81], index: 0, kind: input, shape index: {}]
  %s1 = inlined_call_operand.vmem [shape: bf16[81,256], index: 1, kind: input, shape index: {}]
  %s2 = inlined_call_operand.vmem [shape: f32[1,256], index: 2, kind: input, shape index: {}]
  %s3 = inlined_call_operand.hbm [shape: bf16[256,384], index: 3, kind: input, shape index: {}]
  %s4 = inlined_call_operand.vmem [shape: f32[1,384], index: 4, kind: input, shape index: {}]
  %s5 = inlined_call_operand.hbm [shape: bf16[384,128], index: 5, kind: input, shape index: {}]
  %s6 = inlined_call_operand.vmem [shape: f32[1,128], index: 6, kind: input, shape index: {}]
  %s7 = inlined_call_operand.vmem [shape: bf16[128,128], index: 7, kind: input, shape index: {}]
  %s8 = inlined_call_operand.vmem [shape: f32[1,128], index: 8, kind: input, shape index: {}]
  %s9 = inlined_call_operand.vmem [shape: bf16[8,128], index: 9, kind: output, shape index: {}]
  %s10 = sld [smem:[#allocation0]]
  $region54: #{timeseries_cnn_forward.1} parent=0
    _
  %s12 = ssub.s32 1, %s10
  %s13 = scalar_select 0, %s12, %s10
  $region1: #{timeseries_cnn_forward.1} parent=0
    #allocation2 [shape = 'u8[196608]{0}', space=vmem, size = 0x30000, scoped, tag = 'input window, operand 3, single buffered']
    #allocation3 [shape = 's32[1]{0}', space=sflag, size = 0x4, scoped, tag = 'scoped memory for timeseries_cnn_forward.1']
    #allocation4 [shape = 'u8[98304]{0}', space=vmem, size = 0x18000, scoped, tag = 'input window, operand 5, single buffered']
    #allocation5 [shape = 's32[1]{0}', space=sflag, size = 0x4, scoped, tag = 'scoped memory for timeseries_cnn_forward.1']
    %14 = vsyncpa [#allocation3], 0
    %15 = vsyncpa [#allocation5], 0
    // Predicated region
    $region2: #{timeseries_cnn_forward.1} parent=1 // pred_check
      _
    $region3: #{timeseries_cnn_forward.1} parent=1 // pred_check_branch
      %17 = sbr.rel (0) target = $region5
    $region4: #{timeseries_cnn_forward.1} parent=1 // pred_region
      _
    $region5: #{timeseries_cnn_forward.1} parent=1 // pred_fallthru
      _
    // Predicated region
    $region6: #{timeseries_cnn_forward.1} parent=1 // pred_check
      _
    $region7: #{timeseries_cnn_forward.1} parent=1 // pred_check_branch
      %19 = sbr.rel (0) target = $region9
    $region8: #{timeseries_cnn_forward.1} parent=1 // pred_region
      _
    $region9: #{timeseries_cnn_forward.1} parent=1 // pred_fallthru
      _
    // Predicated region
    $region10: #{timeseries_cnn_forward.1} parent=1 // pred_check
      _
    $region11: #{timeseries_cnn_forward.1} parent=1 // pred_check_branch
      %21 = sbr.rel (0) target = $region13
    $region12: #{timeseries_cnn_forward.1} parent=1 // pred_region
      _
    $region13: #{timeseries_cnn_forward.1} parent=1 // pred_fallthru
      _
    // Predicated region
    $region14: #{timeseries_cnn_forward.1} parent=1 // pred_check
      _
    $region15: #{timeseries_cnn_forward.1} parent=1 // pred_check_branch
      %23 = sbr.rel (0) target = $region17
    $region16: #{timeseries_cnn_forward.1} parent=1 // pred_region
      %s25 = ssub.s32 6144, 6144
      %26 = vsyncadd [#allocation3], %s25
      %s27 = sshll.u32 [#allocation2], 4
      %s28 = int_to_ptr.vmem [resolvable:$true] %s27
      %33 = dma.hbm_to_vmem [thread:$0]  %s3, 6144, %s28, [#allocation3], 192, 192, 12
    $region17: #{timeseries_cnn_forward.1} parent=1 // pred_fallthru
      _
    // Predicated region
    $region18: #{timeseries_cnn_forward.1} parent=1 // pred_check
      _
    $region19: #{timeseries_cnn_forward.1} parent=1 // pred_check_branch
      %35 = sbr.rel (0) target = $region21
    $region20: #{timeseries_cnn_forward.1} parent=1 // pred_region
      _
    $region21: #{timeseries_cnn_forward.1} parent=1 // pred_fallthru
      _
    // Predicated region
    $region22: #{timeseries_cnn_forward.1} parent=1 // pred_check
      _
    $region23: #{timeseries_cnn_forward.1} parent=1 // pred_check_branch
      %37 = sbr.rel (0) target = $region25
    $region24: #{timeseries_cnn_forward.1} parent=1 // pred_region
      %s39 = ssub.s32 3072, 3072
      %40 = vsyncadd [#allocation5], %s39
      %s41 = sshll.u32 [#allocation4], 4
      %s42 = int_to_ptr.vmem [resolvable:$true] %s41
      %47 = dma.hbm_to_vmem [thread:$0]  %s5, 3072, %s42, [#allocation5], 64, 64, 4
    $region25: #{timeseries_cnn_forward.1} parent=1 // pred_fallthru
      _
    // Predicated region
    $region26: #{timeseries_cnn_forward.1} parent=1 // pred_check
      _
    $region27: #{timeseries_cnn_forward.1} parent=1 // pred_check_branch
      %49 = sbr.rel (0) target = $region29
    $region28: #{timeseries_cnn_forward.1} parent=1 // pred_region
      _
    $region29: #{timeseries_cnn_forward.1} parent=1 // pred_fallthru
      _
    // Predicated region
    $region30: #{timeseries_cnn_forward.1} parent=1 // pred_check
      _
    $region31: #{timeseries_cnn_forward.1} parent=1 // pred_check_branch
      %51 = sbr.rel (0) target = $region33
    $region32: #{timeseries_cnn_forward.1} parent=1 // pred_region
      _
    $region33: #{timeseries_cnn_forward.1} parent=1 // pred_fallthru
      _
    // Predicated region
    $region34: #{timeseries_cnn_forward.1} parent=1 // pred_check
      _
    $region35: #{timeseries_cnn_forward.1} parent=1 // pred_check_branch
      %53 = sbr.rel (0) target = $region37
    $region36: #{timeseries_cnn_forward.1} parent=1 // pred_region
      _
    $region37: #{timeseries_cnn_forward.1} parent=1 // pred_fallthru
      _
    // Predicated region
    $region38: #{timeseries_cnn_forward.1} parent=1 // pred_check
      _
    $region39: #{timeseries_cnn_forward.1} parent=1 // pred_check_branch
      %55 = sbr.rel (0) target = $region41
    $region40: #{timeseries_cnn_forward.1} parent=1 // pred_region
      %56 = dma.done [#allocation3], 6144
    $region41: #{timeseries_cnn_forward.1} parent=1 // pred_fallthru
      _
    // Predicated region
    $region42: #{timeseries_cnn_forward.1} parent=1 // pred_check
      _
    $region43: #{timeseries_cnn_forward.1} parent=1 // pred_check_branch
      %58 = sbr.rel (0) target = $region45
    $region44: #{timeseries_cnn_forward.1} parent=1 // pred_region
      %59 = dma.done [#allocation5], 3072
    $region45: #{timeseries_cnn_forward.1} parent=1 // pred_fallthru
      _
    %v61 = vld [vmem:[%s0] sm:$0xff]
    %v62 = vpack.c.bf16 %v61, %v61
    %v63 = vld [vmem:[%s1] sm:$0xff]
    %v64 = vld [vmem:[%s1 + $0x8] sm:$0xff]
    %v65 = vld [vmem:[%s1 + $0x10] sm:$0xff]
    %v66 = vld [vmem:[%s1 + $0x18] sm:$0xff]
    %v67 = vld [vmem:[%s1 + $0x20] sm:$0xff]
    %v68 = vld [vmem:[%s1 + $0x28] sm:$0xff]
    %v69 = vld [vmem:[%s1 + $0x30] sm:$0xff]
    %v70 = vld [vmem:[%s1 + $0x38] sm:$0xff]
    %v71 = vld [vmem:[%s1 + $0x40] sm:$0xff]
    %v72 = vld [vmem:[%s1 + $0x48] sm:$0xff]
    %v73 = vld [vmem:[%s1 + $0x50] sm:$0x11]
    %v74 = vld [vmem:[%s2] sm:$0x3]
    %v76 = vlaneseq
    %v77 = vshrl.u32 %v76, 7
    %v78 = vsub.s32 0, %v77
    %v79 = vrot.slane %v74, %v78
    %v80 = vlaneseq
    %v81 = vshrl.u32 %v80, 7
    %v82 = vsub.s32 1, %v81
    %v83 = vrot.slane %v74, %v82
    %v97 = vunpack.c.l.b16 %v63
    %v98 = vunpack.c.h.b16 %v63
    %v99 = vunpack.c.l.b16 %v64
    %v100 = vunpack.c.h.b16 %v64
    %v101 = vunpack.c.l.b16 %v65
    %v102 = vunpack.c.h.b16 %v65
    %v103 = vunpack.c.l.b16 %v66
    %v104 = vunpack.c.h.b16 %v66
    %v105 = vunpack.c.l.b16 %v67
    %v106 = vunpack.c.h.b16 %v67
    %v107 = vunpack.c.l.b16 %v68
    %v108 = vunpack.c.h.b16 %v68
    %v109 = vunpack.c.l.b16 %v69
    %v110 = vunpack.c.h.b16 %v69
    %v111 = vunpack.c.l.b16 %v70
    %v112 = vunpack.c.h.b16 %v70
    %v113 = vunpack.c.l.b16 %v71
    %v114 = vunpack.c.h.b16 %v71
    %v115 = vunpack.c.l.b16 %v72
    %v116 = vunpack.c.h.b16 %v72
    %v117 = vunpack.c.l.b16 %v73
    %v118 = vunpack.c.h.b16 %v73
    %v119 = vpack.c.b16 %v99, %v97
    %v120 = vpack.c.b16 %v100, %v98
    %v121 = vpack.c.b16 %v103, %v101
    %v122 = vpack.c.b16 %v104, %v102
    %v123 = vpack.c.b16 %v107, %v105
    %v124 = vpack.c.b16 %v108, %v106
    %v125 = vpack.c.b16 %v111, %v109
    %v126 = vpack.c.b16 %v112, %v110
    %v127 = vpack.c.b16 %v115, %v113
    %v128 = vpack.c.b16 %v116, %v114
    %v129 = vpack.c.b16 %v117, %v117
    %v130 = vpack.c.b16 %v118, %v118
    %vm141 = vcmask 662528
    %v143 = vsel %vm141, %v62, 0
    %vm145 = vcmask 1040384
    %v146 = vsel 0, 4294967295, 65535
    %v147 = vsel %vm145, %v146, 0
    %v149 = vand.u32 %v129, %v147
    %v152 = vand.u32 %v130, %v147
    %154 = vmatprep.subr.bf16.mxu0 0
    %155 = vmatpush1.bf16.msra.mxu0 0
    %156 = vmatprep.subr.bf16.mxu0 0
    %157 = vmatpush1.bf16.msra.mxu0 0
    %158 = vmatprep.subr.bf16.mxu0 %v152
    %159 = vmatpush1.bf16.msra.mxu0 %v149
    %160 = vmatprep.subr.bf16.mxu0 %v128
    %161 = vmatpush1.bf16.msra.mxu0 %v127
    %162 = vmatprep.subr.bf16.mxu0 %v126
    %163 = vmatpush1.bf16.msra.mxu0 %v125
    %164 = vmatprep.subr.bf16.mxu0 %v124
    %165 = vmatpush1.bf16.msra.mxu0 %v123
    %166 = vmatprep.subr.bf16.mxu0 %v122
    %167 = vmatpush1.bf16.msra.mxu0 %v121
    %168 = vmatprep.subr.bf16.mxu0 %v120
    %169 = vmatpush1.bf16.msra.mxu0 %v119
    %170 = vmatprep.subr.bf16.mxu0 0
    %171 = vmatpush2.bf16.msra.mxu0 0
    %172 = vmatprep.subr.bf16.mxu0 0
    %173 = vmatpush2.bf16.msra.mxu0 0
    %174 = vmatprep.subr.bf16.mxu0 0
    %175 = vmatpush2.bf16.msra.mxu0 0
    %176 = vmatprep.subr.bf16.mxu0 0
    %177 = vmatpush2.bf16.msra.mxu0 0
    %178 = vmatprep.subr.bf16.mxu0 0
    %179 = vmatpush2.bf16.msra.mxu0 0
    %180 = vmatprep.subr.bf16.mxu0 0
    %181 = vmatpush2.bf16.msra.mxu0 0
    %182 = vmatprep.subr.bf16.mxu0 0
    %183 = vmatpush2.bf16.msra.mxu0 0
    %184 = vmatprep.subr.bf16.mxu0 0
    %185 = vmatpush2.bf16.msra.mxu0 0
    %186 = vmatprep.mubr.bf16.mxu0 0
    %187 = vmatmul.mubr.bf16.gmra.mxu0 %v143
    %v188 = vpop.f32.mrf.mxu0
    %v189 = vadd.f32 %v79, %v188
    %v190 = vpop.f32.mrf.mxu0
    %v191 = vadd.f32 %v83, %v190
    %v192 = vpop.f32.mrf.mxu0
    %v193 = vpop.f32.mrf.mxu0
    %194 = vdwg.mxu0
    %v195 = vmax.f32 %v189, 0.0
    %v196 = vmax.f32 %v191, 0.0
    %v197 = vpack.c.bf16 %v195, %v195
    %v198 = vpack.c.bf16 %v196, %v196
    %v199 = vld [vmem:[#allocation2] sm:$0xff]
    %v200 = vld [vmem:[#allocation2 + $0x8] sm:$0xf]
    %v201 = vld [vmem:[#allocation2 + $0xc] sm:$0xff]
    %v202 = vld [vmem:[#allocation2 + $0x14] sm:$0xf]
    %v203 = vld [vmem:[#allocation2 + $0x18] sm:$0xff]
    %v204 = vld [vmem:[#allocation2 + $0x20] sm:$0xf]
    %v205 = vld [vmem:[#allocation2 + $0x24] sm:$0xff]
    %v206 = vld [vmem:[#allocation2 + $0x2c] sm:$0xf]
    %v207 = vld [vmem:[#allocation2 + $0x30] sm:$0xff]
    %v208 = vld [vmem:[#allocation2 + $0x38] sm:$0xf]
    %v209 = vld [vmem:[#allocation2 + $0x3c] sm:$0xff]
    %v210 = vld [vmem:[#allocation2 + $0x44] sm:$0xf]
    %v211 = vld [vmem:[#allocation2 + $0x48] sm:$0xff]
    %v212 = vld [vmem:[#allocation2 + $0x50] sm:$0xf]
    %v213 = vld [vmem:[#allocation2 + $0x54] sm:$0xff]
    %v214 = vld [vmem:[#allocation2 + $0x5c] sm:$0xf]
    %v215 = vld [vmem:[#allocation2 + $0x60] sm:$0xff]
    %v216 = vld [vmem:[#allocation2 + $0x68] sm:$0xf]
    %v217 = vld [vmem:[#allocation2 + $0x6c] sm:$0xff]
    %v218 = vld [vmem:[#allocation2 + $0x74] sm:$0xf]
    %v219 = vld [vmem:[#allocation2 + $0x78] sm:$0xff]
    %v220 = vld [vmem:[#allocation2 + $0x80] sm:$0xf]
    %v221 = vld [vmem:[#allocation2 + $0x84] sm:$0xff]
    %v222 = vld [vmem:[#allocation2 + $0x8c] sm:$0xf]
    %v223 = vld [vmem:[#allocation2 + $0x90] sm:$0xff]
    %v224 = vld [vmem:[#allocation2 + $0x98] sm:$0xf]
    %v225 = vld [vmem:[#allocation2 + $0x9c] sm:$0xff]
    %v226 = vld [vmem:[#allocation2 + $0xa4] sm:$0xf]
    %v227 = vld [vmem:[#allocation2 + $0xa8] sm:$0xff]
    %v228 = vld [vmem:[#allocation2 + $0xb0] sm:$0xf]
    %v229 = vld [vmem:[#allocation2 + $0xb4] sm:$0xff]
    %v230 = vld [vmem:[#allocation2 + $0xbc] sm:$0xf]
    %v231 = vld [vmem:[#allocation2 + $0xc0] sm:$0xff]
    %v232 = vld [vmem:[#allocation2 + $0xc8] sm:$0xf]
    %v233 = vld [vmem:[#allocation2 + $0xcc] sm:$0xff]
    %v234 = vld [vmem:[#allocation2 + $0xd4] sm:$0xf]
    %v235 = vld [vmem:[#allocation2 + $0xd8] sm:$0xff]
    %v236 = vld [vmem:[#allocation2 + $0xe0] sm:$0xf]
    %v237 = vld [vmem:[#allocation2 + $0xe4] sm:$0xff]
    %v238 = vld [vmem:[#allocation2 + $0xec] sm:$0xf]
    %v239 = vld [vmem:[#allocation2 + $0xf0] sm:$0xff]
    %v240 = vld [vmem:[#allocation2 + $0xf8] sm:$0xf]
    %v241 = vld [vmem:[#allocation2 + $0xfc] sm:$0xff]
    %v242 = vld [vmem:[#allocation2 + $0x104] sm:$0xf]
    %v243 = vld [vmem:[#allocation2 + $0x108] sm:$0xff]
    %v244 = vld [vmem:[#allocation2 + $0x110] sm:$0xf]
    %v245 = vld [vmem:[#allocation2 + $0x114] sm:$0xff]
    %v246 = vld [vmem:[#allocation2 + $0x11c] sm:$0xf]
    %v247 = vld [vmem:[#allocation2 + $0x120] sm:$0xff]
    %v248 = vld [vmem:[#allocation2 + $0x128] sm:$0xf]
    %v249 = vld [vmem:[#allocation2 + $0x12c] sm:$0xff]
    %v250 = vld [vmem:[#allocation2 + $0x134] sm:$0xf]
    %v251 = vld [vmem:[#allocation2 + $0x138] sm:$0xff]
    %v252 = vld [vmem:[#allocation2 + $0x140] sm:$0xf]
    %v253 = vld [vmem:[#allocation2 + $0x144] sm:$0xff]
    %v254 = vld [vmem:[#allocation2 + $0x14c] sm:$0xf]
    %v255 = vld [vmem:[#allocation2 + $0x150] sm:$0xff]
    %v256 = vld [vmem:[#allocation2 + $0x158] sm:$0xf]
    %v257 = vld [vmem:[#allocation2 + $0x15c] sm:$0xff]
    %v258 = vld [vmem:[#allocation2 + $0x164] sm:$0xf]
    %v259 = vld [vmem:[#allocation2 + $0x168] sm:$0xff]
    %v260 = vld [vmem:[#allocation2 + $0x170] sm:$0xf]
    %v261 = vld [vmem:[#allocation2 + $0x174] sm:$0xff]
    %v262 = vld [vmem:[#allocation2 + $0x17c] sm:$0xf]
    %v263 = vld [vmem:[%s4] sm:$0x7]
    %v265 = vlaneseq
    %v266 = vshrl.u32 %v265, 7
    %v267 = vsub.s32 0, %v266
    %v268 = vrot.slane %v263, %v267
    %v269 = vlaneseq
    %v270 = vshrl.u32 %v269, 7
    %v271 = vsub.s32 1, %v270
    %v272 = vrot.slane %v263, %v271
    %v273 = vlaneseq
    %v274 = vshrl.u32 %v273, 7
    %v275 = vsub.s32 2, %v274
    %v276 = vrot.slane %v263, %v275
    %v344 = vunpack.c.l.b16 %v199
    %v345 = vunpack.c.h.b16 %v199
    %v346 = vunpack.c.l.b16 %v200
    %v347 = vunpack.c.l.b16 %v201
    %v348 = vunpack.c.h.b16 %v201
    %v349 = vunpack.c.l.b16 %v202
    %v350 = vunpack.c.l.b16 %v203
    %v351 = vunpack.c.h.b16 %v203
    %v352 = vunpack.c.l.b16 %v204
    %v353 = vunpack.c.l.b16 %v205
    %v354 = vunpack.c.h.b16 %v205
    %v355 = vunpack.c.l.b16 %v206
    %v356 = vunpack.c.l.b16 %v207
    %v357 = vunpack.c.h.b16 %v207
    %v358 = vunpack.c.l.b16 %v208
    %v359 = vunpack.c.l.b16 %v209
    %v360 = vunpack.c.h.b16 %v209
    %v361 = vunpack.c.l.b16 %v210
    %v362 = vunpack.c.l.b16 %v211
    %v363 = vunpack.c.h.b16 %v211
    %v364 = vunpack.c.l.b16 %v212
    %v365 = vunpack.c.l.b16 %v213
    %v366 = vunpack.c.h.b16 %v213
    %v367 = vunpack.c.l.b16 %v214
    %v368 = vunpack.c.l.b16 %v215
    %v369 = vunpack.c.h.b16 %v215
    %v370 = vunpack.c.l.b16 %v216
    %v371 = vunpack.c.l.b16 %v217
    %v372 = vunpack.c.h.b16 %v217
    %v373 = vunpack.c.l.b16 %v218
    %v374 = vunpack.c.l.b16 %v219
    %v375 = vunpack.c.h.b16 %v219
    %v376 = vunpack.c.l.b16 %v220
    %v377 = vunpack.c.l.b16 %v221
    %v378 = vunpack.c.h.b16 %v221
    %v379 = vunpack.c.l.b16 %v222
    %v380 = vunpack.c.l.b16 %v223
    %v381 = vunpack.c.h.b16 %v223
    %v382 = vunpack.c.l.b16 %v224
    %v383 = vunpack.c.l.b16 %v225
    %v384 = vunpack.c.h.b16 %v225
    %v385 = vunpack.c.l.b16 %v226
    %v386 = vunpack.c.l.b16 %v227
    %v387 = vunpack.c.h.b16 %v227
    %v388 = vunpack.c.l.b16 %v228
    %v389 = vunpack.c.l.b16 %v229
    %v390 = vunpack.c.h.b16 %v229
    %v391 = vunpack.c.l.b16 %v230
    %v392 = vunpack.c.l.b16 %v231
    %v393 = vunpack.c.h.b16 %v231
    %v394 = vunpack.c.l.b16 %v232
    %v395 = vunpack.c.l.b16 %v233
    %v396 = vunpack.c.h.b16 %v233
    %v397 = vunpack.c.l.b16 %v234
    %v398 = vunpack.c.l.b16 %v235
    %v399 = vunpack.c.h.b16 %v235
    %v400 = vunpack.c.l.b16 %v236
    %v401 = vunpack.c.l.b16 %v237
    %v402 = vunpack.c.h.b16 %v237
    %v403 = vunpack.c.l.b16 %v238
    %v404 = vunpack.c.l.b16 %v239
    %v405 = vunpack.c.h.b16 %v239
    %v406 = vunpack.c.l.b16 %v240
    %v407 = vunpack.c.l.b16 %v241
    %v408 = vunpack.c.h.b16 %v241
    %v409 = vunpack.c.l.b16 %v242
    %v410 = vunpack.c.l.b16 %v243
    %v411 = vunpack.c.h.b16 %v243
    %v412 = vunpack.c.l.b16 %v244
    %v413 = vunpack.c.l.b16 %v245
    %v414 = vunpack.c.h.b16 %v245
    %v415 = vunpack.c.l.b16 %v246
    %v416 = vunpack.c.l.b16 %v247
    %v417 = vunpack.c.h.b16 %v247
    %v418 = vunpack.c.l.b16 %v248
    %v419 = vunpack.c.l.b16 %v249
    %v420 = vunpack.c.h.b16 %v249
    %v421 = vunpack.c.l.b16 %v250
    %v422 = vunpack.c.l.b16 %v251
    %v423 = vunpack.c.h.b16 %v251
    %v424 = vunpack.c.l.b16 %v252
    %v425 = vunpack.c.l.b16 %v253
    %v426 = vunpack.c.h.b16 %v253
    %v427 = vunpack.c.l.b16 %v254
    %v428 = vunpack.c.l.b16 %v255
    %v429 = vunpack.c.h.b16 %v255
    %v430 = vunpack.c.l.b16 %v256
    %v431 = vunpack.c.l.b16 %v257
    %v432 = vunpack.c.h.b16 %v257
    %v433 = vunpack.c.l.b16 %v258
    %v434 = vunpack.c.l.b16 %v259
    %v435 = vunpack.c.h.b16 %v259
    %v436 = vunpack.c.l.b16 %v260
    %v437 = vunpack.c.l.b16 %v261
    %v438 = vunpack.c.h.b16 %v261
    %v439 = vunpack.c.l.b16 %v262
    %v440 = vpack.c.b16 %v347, %v344
    %v441 = vpack.c.b16 %v348, %v345
    %v442 = vpack.c.b16 %v349, %v346
    %v443 = vpack.c.b16 %v353, %v350
    %v444 = vpack.c.b16 %v354, %v351
    %v445 = vpack.c.b16 %v355, %v352
    %v446 = vpack.c.b16 %v359, %v356
    %v447 = vpack.c.b16 %v360, %v357
    %v448 = vpack.c.b16 %v361, %v358
    %v449 = vpack.c.b16 %v365, %v362
    %v450 = vpack.c.b16 %v366, %v363
    %v451 = vpack.c.b16 %v367, %v364
    %v452 = vpack.c.b16 %v371, %v368
    %v453 = vpack.c.b16 %v372, %v369
    %v454 = vpack.c.b16 %v373, %v370
    %v455 = vpack.c.b16 %v377, %v374
    %v456 = vpack.c.b16 %v378, %v375
    %v457 = vpack.c.b16 %v379, %v376
    %v458 = vpack.c.b16 %v383, %v380
    %v459 = vpack.c.b16 %v384, %v381
    %v460 = vpack.c.b16 %v385, %v382
    %v461 = vpack.c.b16 %v389, %v386
    %v462 = vpack.c.b16 %v390, %v387
    %v463 = vpack.c.b16 %v391, %v388
    %v464 = vpack.c.b16 %v395, %v392
    %v465 = vpack.c.b16 %v396, %v393
    %v466 = vpack.c.b16 %v397, %v394
    %v467 = vpack.c.b16 %v401, %v398
    %v468 = vpack.c.b16 %v402, %v399
    %v469 = vpack.c.b16 %v403, %v400
    %v470 = vpack.c.b16 %v407, %v404
    %v471 = vpack.c.b16 %v408, %v405
    %v472 = vpack.c.b16 %v409, %v406
    %v473 = vpack.c.b16 %v413, %v410
    %v474 = vpack.c.b16 %v414, %v411
    %v475 = vpack.c.b16 %v415, %v412
    %v476 = vpack.c.b16 %v419, %v416
    %v477 = vpack.c.b16 %v420, %v417
    %v478 = vpack.c.b16 %v421, %v418
    %v479 = vpack.c.b16 %v425, %v422
    %v480 = vpack.c.b16 %v426, %v423
    %v481 = vpack.c.b16 %v427, %v424
    %v482 = vpack.c.b16 %v431, %v428
    %v483 = vpack.c.b16 %v432, %v429
    %v484 = vpack.c.b16 %v433, %v430
    %v485 = vpack.c.b16 %v437, %v434
    %v486 = vpack.c.b16 %v438, %v435
    %v487 = vpack.c.b16 %v439, %v436
    %536 = vmatprep.subr.bf16.mxu0 %v462
    %537 = vmatpush1.bf16.msra.mxu0 %v461
    %538 = vmatprep.subr.bf16.mxu0 %v459
    %539 = vmatpush1.bf16.msra.mxu0 %v458
    %540 = vmatprep.subr.bf16.mxu0 %v456
    %541 = vmatpush1.bf16.msra.mxu0 %v455
    %542 = vmatprep.subr.bf16.mxu0 %v453
    %543 = vmatpush1.bf16.msra.mxu0 %v452
    %544 = vmatprep.subr.bf16.mxu0 %v450
    %545 = vmatpush1.bf16.msra.mxu0 %v449
    %546 = vmatprep.subr.bf16.mxu0 %v447
    %547 = vmatpush1.bf16.msra.mxu0 %v446
    %548 = vmatprep.subr.bf16.mxu0 %v444
    %549 = vmatpush1.bf16.msra.mxu0 %v443
    %550 = vmatprep.subr.bf16.mxu0 %v441
    %551 = vmatpush1.bf16.msra.mxu0 %v440
    %552 = vmatprep.subr.bf16.mxu0 %v486
    %553 = vmatpush2.bf16.msra.mxu0 %v485
    %554 = vmatprep.subr.bf16.mxu0 %v483
    %555 = vmatpush2.bf16.msra.mxu0 %v482
    %556 = vmatprep.subr.bf16.mxu0 %v480
    %557 = vmatpush2.bf16.msra.mxu0 %v479
    %558 = vmatprep.subr.bf16.mxu0 %v477
    %559 = vmatpush2.bf16.msra.mxu0 %v476
    %560 = vmatprep.subr.bf16.mxu0 %v474
    %561 = vmatpush2.bf16.msra.mxu0 %v473
    %562 = vmatprep.subr.bf16.mxu0 %v471
    %563 = vmatpush2.bf16.msra.mxu0 %v470
    %564 = vmatprep.subr.bf16.mxu0 %v468
    %565 = vmatpush2.bf16.msra.mxu0 %v467
    %566 = vmatprep.subr.bf16.mxu0 %v465
    %567 = vmatpush2.bf16.msra.mxu0 %v464
    %568 = vmatprep.mubr.bf16.mxu0 %v198
    %569 = vmatmul.mubr.bf16.gmra.mxu0 %v197
    %v570 = vpop.f32.mrf.mxu0
    %v571 = vadd.f32 %v268, %v570
    %v572 = vpop.f32.mrf.mxu0
    %v573 = vadd.f32 %v272, %v572
    %v574 = vpop.f32.mrf.mxu0
    %v575 = vpop.f32.mrf.mxu0
    %576 = vdwg.mxu0
    %577 = vmatprep.subr.bf16.mxu0 0
    %578 = vmatpush1.bf16.msra.mxu0 %v463
    %579 = vmatprep.subr.bf16.mxu0 0
    %580 = vmatpush1.bf16.msra.mxu0 %v460
    %581 = vmatprep.subr.bf16.mxu0 0
    %582 = vmatpush1.bf16.msra.mxu0 %v457
    %583 = vmatprep.subr.bf16.mxu0 0
    %584 = vmatpush1.bf16.msra.mxu0 %v454
    %585 = vmatprep.subr.bf16.mxu0 0
    %586 = vmatpush1.bf16.msra.mxu0 %v451
    %587 = vmatprep.subr.bf16.mxu0 0
    %588 = vmatpush1.bf16.msra.mxu0 %v448
    %589 = vmatprep.subr.bf16.mxu0 0
    %590 = vmatpush1.bf16.msra.mxu0 %v445
    %591 = vmatprep.subr.bf16.mxu0 0
    %592 = vmatpush1.bf16.msra.mxu0 %v442
    %593 = vmatprep.subr.bf16.mxu0 0
    %594 = vmatpush2.bf16.msra.mxu0 %v487
    %595 = vmatprep.subr.bf16.mxu0 0
    %596 = vmatpush2.bf16.msra.mxu0 %v484
    %597 = vmatprep.subr.bf16.mxu0 0
    %598 = vmatpush2.bf16.msra.mxu0 %v481
    %599 = vmatprep.subr.bf16.mxu0 0
    %600 = vmatpush2.bf16.msra.mxu0 %v478
    %601 = vmatprep.subr.bf16.mxu0 0
    %602 = vmatpush2.bf16.msra.mxu0 %v475
    %603 = vmatprep.subr.bf16.mxu0 0
    %604 = vmatpush2.bf16.msra.mxu0 %v472
    %605 = vmatprep.subr.bf16.mxu0 0
    %606 = vmatpush2.bf16.msra.mxu0 %v469
    %607 = vmatprep.subr.bf16.mxu0 0
    %608 = vmatpush2.bf16.msra.mxu0 %v466
    %609 = vmatprep.mubr.bf16.mxu0 %v198
    %610 = vmatmul.mubr.bf16.gmra.mxu0 %v197
    %v611 = vpop.f32.mrf.mxu0
    %v612 = vadd.f32 %v276, %v611
    %v613 = vpop.f32.mrf.mxu0
    %v614 = vpop.f32.mrf.mxu0
    %v615 = vpop.f32.mrf.mxu0
    %616 = vdwg.mxu0
    %v617 = vmax.f32 %v571, 0.0
    %v618 = vmax.f32 %v573, 0.0
    %v619 = vmax.f32 %v612, 0.0
    %v620 = vpack.c.bf16 %v617, %v617
    %v621 = vpack.c.bf16 %v618, %v618
    %v622 = vpack.c.bf16 %v619, %v619
    %v623 = vld [vmem:[#allocation4] sm:$0xf]
    %v624 = vld [vmem:[#allocation4 + $0x4] sm:$0xf]
    %v625 = vld [vmem:[#allocation4 + $0x8] sm:$0xf]
    %v626 = vld [vmem:[#allocation4 + $0xc] sm:$0xf]
    %v627 = vld [vmem:[#allocation4 + $0x10] sm:$0xf]
    %v628 = vld [vmem:[#allocation4 + $0x14] sm:$0xf]
    %v629 = vld [vmem:[#allocation4 + $0x18] sm:$0xf]
    %v630 = vld [vmem:[#allocation4 + $0x1c] sm:$0xf]
    %v631 = vld [vmem:[#allocation4 + $0x20] sm:$0xf]
    %v632 = vld [vmem:[#allocation4 + $0x24] sm:$0xf]
    %v633 = vld [vmem:[#allocation4 + $0x28] sm:$0xf]
    %v634 = vld [vmem:[#allocation4 + $0x2c] sm:$0xf]
    %v635 = vld [vmem:[#allocation4 + $0x30] sm:$0xf]
    %v636 = vld [vmem:[#allocation4 + $0x34] sm:$0xf]
    %v637 = vld [vmem:[#allocation4 + $0x38] sm:$0xf]
    %v638 = vld [vmem:[#allocation4 + $0x3c] sm:$0xf]
    %v639 = vld [vmem:[#allocation4 + $0x40] sm:$0xf]
    %v640 = vld [vmem:[#allocation4 + $0x44] sm:$0xf]
    %v641 = vld [vmem:[#allocation4 + $0x48] sm:$0xf]
    %v642 = vld [vmem:[#allocation4 + $0x4c] sm:$0xf]
    %v643 = vld [vmem:[#allocation4 + $0x50] sm:$0xf]
    %v644 = vld [vmem:[#allocation4 + $0x54] sm:$0xf]
    %v645 = vld [vmem:[#allocation4 + $0x58] sm:$0xf]
    %v646 = vld [vmem:[#allocation4 + $0x5c] sm:$0xf]
    %v647 = vld [vmem:[#allocation4 + $0x60] sm:$0xf]
    %v648 = vld [vmem:[#allocation4 + $0x64] sm:$0xf]
    %v649 = vld [vmem:[#allocation4 + $0x68] sm:$0xf]
    %v650 = vld [vmem:[#allocation4 + $0x6c] sm:$0xf]
    %v651 = vld [vmem:[#allocation4 + $0x70] sm:$0xf]
    %v652 = vld [vmem:[#allocation4 + $0x74] sm:$0xf]
    %v653 = vld [vmem:[#allocation4 + $0x78] sm:$0xf]
    %v654 = vld [vmem:[#allocation4 + $0x7c] sm:$0xf]
    %v655 = vld [vmem:[#allocation4 + $0x80] sm:$0xf]
    %v656 = vld [vmem:[#allocation4 + $0x84] sm:$0xf]
    %v657 = vld [vmem:[#allocation4 + $0x88] sm:$0xf]
    %v658 = vld [vmem:[#allocation4 + $0x8c] sm:$0xf]
    %v659 = vld [vmem:[#allocation4 + $0x90] sm:$0xf]
    %v660 = vld [vmem:[#allocation4 + $0x94] sm:$0xf]
    %v661 = vld [vmem:[#allocation4 + $0x98] sm:$0xf]
    %v662 = vld [vmem:[#allocation4 + $0x9c] sm:$0xf]
    %v663 = vld [vmem:[#allocation4 + $0xa0] sm:$0xf]
    %v664 = vld [vmem:[#allocation4 + $0xa4] sm:$0xf]
    %v665 = vld [vmem:[#allocation4 + $0xa8] sm:$0xf]
    %v666 = vld [vmem:[#allocation4 + $0xac] sm:$0xf]
    %v667 = vld [vmem:[#allocation4 + $0xb0] sm:$0xf]
    %v668 = vld [vmem:[#allocation4 + $0xb4] sm:$0xf]
    %v669 = vld [vmem:[#allocation4 + $0xb8] sm:$0xf]
    %v670 = vld [vmem:[#allocation4 + $0xbc] sm:$0xf]
    %v671 = vld [vmem:[%s6] sm:$0x1]
    %v673 = vlaneseq
    %v674 = vshrl.u32 %v673, 7
    %v675 = vsub.s32 0, %v674
    %v676 = vrot.slane %v671, %v675
    %v726 = vunpack.c.l.b16 %v623
    %v727 = vunpack.c.l.b16 %v624
    %v728 = vunpack.c.l.b16 %v625
    %v729 = vunpack.c.l.b16 %v626
    %v730 = vunpack.c.l.b16 %v627
    %v731 = vunpack.c.l.b16 %v628
    %v732 = vunpack.c.l.b16 %v629
    %v733 = vunpack.c.l.b16 %v630
    %v734 = vunpack.c.l.b16 %v631
    %v735 = vunpack.c.l.b16 %v632
    %v736 = vunpack.c.l.b16 %v633
    %v737 = vunpack.c.l.b16 %v634
    %v738 = vunpack.c.l.b16 %v635
    %v739 = vunpack.c.l.b16 %v636
    %v740 = vunpack.c.l.b16 %v637
    %v741 = vunpack.c.l.b16 %v638
    %v742 = vunpack.c.l.b16 %v639
    %v743 = vunpack.c.l.b16 %v640
    %v744 = vunpack.c.l.b16 %v641
    %v745 = vunpack.c.l.b16 %v642
    %v746 = vunpack.c.l.b16 %v643
    %v747 = vunpack.c.l.b16 %v644
    %v748 = vunpack.c.l.b16 %v645
    %v749 = vunpack.c.l.b16 %v646
    %v750 = vunpack.c.l.b16 %v647
    %v751 = vunpack.c.l.b16 %v648
    %v752 = vunpack.c.l.b16 %v649
    %v753 = vunpack.c.l.b16 %v650
    %v754 = vunpack.c.l.b16 %v651
    %v755 = vunpack.c.l.b16 %v652
    %v756 = vunpack.c.l.b16 %v653
    %v757 = vunpack.c.l.b16 %v654
    %v758 = vunpack.c.l.b16 %v655
    %v759 = vunpack.c.l.b16 %v656
    %v760 = vunpack.c.l.b16 %v657
    %v761 = vunpack.c.l.b16 %v658
    %v762 = vunpack.c.l.b16 %v659
    %v763 = vunpack.c.l.b16 %v660
    %v764 = vunpack.c.l.b16 %v661
    %v765 = vunpack.c.l.b16 %v662
    %v766 = vunpack.c.l.b16 %v663
    %v767 = vunpack.c.l.b16 %v664
    %v768 = vunpack.c.l.b16 %v665
    %v769 = vunpack.c.l.b16 %v666
    %v770 = vunpack.c.l.b16 %v667
    %v771 = vunpack.c.l.b16 %v668
    %v772 = vunpack.c.l.b16 %v669
    %v773 = vunpack.c.l.b16 %v670
    %v774 = vpack.c.b16 %v727, %v726
    %v775 = vpack.c.b16 %v729, %v728
    %v776 = vpack.c.b16 %v731, %v730
    %v777 = vpack.c.b16 %v733, %v732
    %v778 = vpack.c.b16 %v735, %v734
    %v779 = vpack.c.b16 %v737, %v736
    %v780 = vpack.c.b16 %v739, %v738
    %v781 = vpack.c.b16 %v741, %v740
    %v782 = vpack.c.b16 %v743, %v742
    %v783 = vpack.c.b16 %v745, %v744
    %v784 = vpack.c.b16 %v747, %v746
    %v785 = vpack.c.b16 %v749, %v748
    %v786 = vpack.c.b16 %v751, %v750
    %v787 = vpack.c.b16 %v753, %v752
    %v788 = vpack.c.b16 %v755, %v754
    %v789 = vpack.c.b16 %v757, %v756
    %v790 = vpack.c.b16 %v759, %v758
    %v791 = vpack.c.b16 %v761, %v760
    %v792 = vpack.c.b16 %v763, %v762
    %v793 = vpack.c.b16 %v765, %v764
    %v794 = vpack.c.b16 %v767, %v766
    %v795 = vpack.c.b16 %v769, %v768
    %v796 = vpack.c.b16 %v771, %v770
    %v797 = vpack.c.b16 %v773, %v772
    %822 = vmatprep.subr.bf16.mxu0 0
    %823 = vmatpush1.bf16.msra.mxu0 %v781
    %824 = vmatprep.subr.bf16.mxu0 0
    %825 = vmatpush1.bf16.msra.mxu0 %v780
    %826 = vmatprep.subr.bf16.mxu0 0
    %827 = vmatpush1.bf16.msra.mxu0 %v779
    %828 = vmatprep.subr.bf16.mxu0 0
    %829 = vmatpush1.bf16.msra.mxu0 %v778
    %830 = vmatprep.subr.bf16.mxu0 0
    %831 = vmatpush1.bf16.msra.mxu0 %v777
    %832 = vmatprep.subr.bf16.mxu0 0
    %833 = vmatpush1.bf16.msra.mxu0 %v776
    %834 = vmatprep.subr.bf16.mxu0 0
    %835 = vmatpush1.bf16.msra.mxu0 %v775
    %836 = vmatprep.subr.bf16.mxu0 0
    %837 = vmatpush1.bf16.msra.mxu0 %v774
    %838 = vmatprep.subr.bf16.mxu0 0
    %839 = vmatpush2.bf16.msra.mxu0 %v789
    %840 = vmatprep.subr.bf16.mxu0 0
    %841 = vmatpush2.bf16.msra.mxu0 %v788
    %842 = vmatprep.subr.bf16.mxu0 0
    %843 = vmatpush2.bf16.msra.mxu0 %v787
    %844 = vmatprep.subr.bf16.mxu0 0
    %845 = vmatpush2.bf16.msra.mxu0 %v786
    %846 = vmatprep.subr.bf16.mxu0 0
    %847 = vmatpush2.bf16.msra.mxu0 %v785
    %848 = vmatprep.subr.bf16.mxu0 0
    %849 = vmatpush2.bf16.msra.mxu0 %v784
    %850 = vmatprep.subr.bf16.mxu0 0
    %851 = vmatpush2.bf16.msra.mxu0 %v783
    %852 = vmatprep.subr.bf16.mxu0 0
    %853 = vmatpush2.bf16.msra.mxu0 %v782
    %854 = vmatprep.mubr.bf16.mxu0 %v621
    %855 = vmatmul.mubr.bf16.gmra.mxu0 %v620
    %v856 = vpop.f32.mrf.mxu0
    %v857 = vadd.f32 %v676, %v856
    %v858 = vpop.f32.mrf.mxu0
    %v859 = vpop.f32.mrf.mxu0
    %v860 = vpop.f32.mrf.mxu0
    %861 = vdwg.mxu0
    %862 = vmatprep.subr.bf16.mxu0 0
    %863 = vmatpush1.bf16.msra.mxu0 %v797
    %864 = vmatprep.subr.bf16.mxu0 0
    %865 = vmatpush1.bf16.msra.mxu0 %v796
    %866 = vmatprep.subr.bf16.mxu0 0
    %867 = vmatpush1.bf16.msra.mxu0 %v795
    %868 = vmatprep.subr.bf16.mxu0 0
    %869 = vmatpush1.bf16.msra.mxu0 %v794
    %870 = vmatprep.subr.bf16.mxu0 0
    %871 = vmatpush1.bf16.msra.mxu0 %v793
    %872 = vmatprep.subr.bf16.mxu0 0
    %873 = vmatpush1.bf16.msra.mxu0 %v792
    %874 = vmatprep.subr.bf16.mxu0 0
    %875 = vmatpush1.bf16.msra.mxu0 %v791
    %876 = vmatprep.subr.bf16.mxu0 0
    %877 = vmatpush1.bf16.msra.mxu0 %v790
    %878 = vmatprep.subr.bf16.mxu0 0
    %879 = vmatpush2.bf16.msra.mxu0 0
    %880 = vmatprep.subr.bf16.mxu0 0
    %881 = vmatpush2.bf16.msra.mxu0 0
    %882 = vmatprep.subr.bf16.mxu0 0
    %883 = vmatpush2.bf16.msra.mxu0 0
    %884 = vmatprep.subr.bf16.mxu0 0
    %885 = vmatpush2.bf16.msra.mxu0 0
    %886 = vmatprep.subr.bf16.mxu0 0
    %887 = vmatpush2.bf16.msra.mxu0 0
    %888 = vmatprep.subr.bf16.mxu0 0
    %889 = vmatpush2.bf16.msra.mxu0 0
    %890 = vmatprep.subr.bf16.mxu0 0
    %891 = vmatpush2.bf16.msra.mxu0 0
    %892 = vmatprep.subr.bf16.mxu0 0
    %893 = vmatpush2.bf16.msra.mxu0 0
    %894 = vmatprep.mubr.bf16.mxu0 0
    %895 = vmatmul.mubr.bf16.gmra.mxu0 %v622
    %v896 = vpop.f32.mrf.mxu0
    %v897 = vadd.f32 %v857, %v896
    %v898 = vpop.f32.mrf.mxu0
    %v899 = vpop.f32.mrf.mxu0
    %v900 = vpop.f32.mrf.mxu0
    %901 = vdwg.mxu0
    %v902 = vmax.f32 %v897, 0.0
    %v903 = vpack.c.bf16 %v902, %v902
    %v904 = vld [vmem:[%s7] sm:$0xf]
    %v905 = vld [vmem:[%s7 + $0x4] sm:$0xf]
    %v906 = vld [vmem:[%s7 + $0x8] sm:$0xf]
    %v907 = vld [vmem:[%s7 + $0xc] sm:$0xf]
    %v908 = vld [vmem:[%s7 + $0x10] sm:$0xf]
    %v909 = vld [vmem:[%s7 + $0x14] sm:$0xf]
    %v910 = vld [vmem:[%s7 + $0x18] sm:$0xf]
    %v911 = vld [vmem:[%s7 + $0x1c] sm:$0xf]
    %v912 = vld [vmem:[%s7 + $0x20] sm:$0xf]
    %v913 = vld [vmem:[%s7 + $0x24] sm:$0xf]
    %v914 = vld [vmem:[%s7 + $0x28] sm:$0xf]
    %v915 = vld [vmem:[%s7 + $0x2c] sm:$0xf]
    %v916 = vld [vmem:[%s7 + $0x30] sm:$0xf]
    %v917 = vld [vmem:[%s7 + $0x34] sm:$0xf]
    %v918 = vld [vmem:[%s7 + $0x38] sm:$0xf]
    %v919 = vld [vmem:[%s7 + $0x3c] sm:$0xf]
    %v920 = vld [vmem:[%s8] sm:$0x1]
    %v922 = vlaneseq
    %v923 = vshrl.u32 %v922, 7
    %v924 = vsub.s32 0, %v923
    %v925 = vrot.slane %v920, %v924
    %v943 = vunpack.c.l.b16 %v904
    %v944 = vunpack.c.l.b16 %v905
    %v945 = vunpack.c.l.b16 %v906
    %v946 = vunpack.c.l.b16 %v907
    %v947 = vunpack.c.l.b16 %v908
    %v948 = vunpack.c.l.b16 %v909
    %v949 = vunpack.c.l.b16 %v910
    %v950 = vunpack.c.l.b16 %v911
    %v951 = vunpack.c.l.b16 %v912
    %v952 = vunpack.c.l.b16 %v913
    %v953 = vunpack.c.l.b16 %v914
    %v954 = vunpack.c.l.b16 %v915
    %v955 = vunpack.c.l.b16 %v916
    %v956 = vunpack.c.l.b16 %v917
    %v957 = vunpack.c.l.b16 %v918
    %v958 = vunpack.c.l.b16 %v919
    %v959 = vpack.c.b16 %v944, %v943
    %v960 = vpack.c.b16 %v946, %v945
    %v961 = vpack.c.b16 %v948, %v947
    %v962 = vpack.c.b16 %v950, %v949
    %v963 = vpack.c.b16 %v952, %v951
    %v964 = vpack.c.b16 %v954, %v953
    %v965 = vpack.c.b16 %v956, %v955
    %v966 = vpack.c.b16 %v958, %v957
    %975 = vmatprep.subr.bf16.mxu0 0
    %976 = vmatpush1.bf16.msra.mxu0 %v966
    %977 = vmatprep.subr.bf16.mxu0 0
    %978 = vmatpush1.bf16.msra.mxu0 %v965
    %979 = vmatprep.subr.bf16.mxu0 0
    %980 = vmatpush1.bf16.msra.mxu0 %v964
    %981 = vmatprep.subr.bf16.mxu0 0
    %982 = vmatpush1.bf16.msra.mxu0 %v963
    %983 = vmatprep.subr.bf16.mxu0 0
    %984 = vmatpush1.bf16.msra.mxu0 %v962
    %985 = vmatprep.subr.bf16.mxu0 0
    %986 = vmatpush1.bf16.msra.mxu0 %v961
    %987 = vmatprep.subr.bf16.mxu0 0
    %988 = vmatpush1.bf16.msra.mxu0 %v960
    %989 = vmatprep.subr.bf16.mxu0 0
    %990 = vmatpush1.bf16.msra.mxu0 %v959
    %991 = vmatprep.subr.bf16.mxu0 0
    %992 = vmatpush2.bf16.msra.mxu0 0
    %993 = vmatprep.subr.bf16.mxu0 0
    %994 = vmatpush2.bf16.msra.mxu0 0
    %995 = vmatprep.subr.bf16.mxu0 0
    %996 = vmatpush2.bf16.msra.mxu0 0
    %997 = vmatprep.subr.bf16.mxu0 0
    %998 = vmatpush2.bf16.msra.mxu0 0
    %999 = vmatprep.subr.bf16.mxu0 0
    %1000 = vmatpush2.bf16.msra.mxu0 0
    %1001 = vmatprep.subr.bf16.mxu0 0
    %1002 = vmatpush2.bf16.msra.mxu0 0
    %1003 = vmatprep.subr.bf16.mxu0 0
    %1004 = vmatpush2.bf16.msra.mxu0 0
    %1005 = vmatprep.subr.bf16.mxu0 0
    %1006 = vmatpush2.bf16.msra.mxu0 0
    %1007 = vmatprep.mubr.bf16.mxu0 0
    %1008 = vmatmul.mubr.bf16.gmra.mxu0 %v903
    %v1009 = vpop.f32.mrf.mxu0
    %v1010 = vadd.f32 %v925, %v1009
    %v1011 = vpop.f32.mrf.mxu0
    %v1012 = vpop.f32.mrf.mxu0
    %v1013 = vpop.f32.mrf.mxu0
    %1014 = vdwg.mxu0
    %v1015 = vpack.c.bf16 %v1010, %v1010
    %1016 = vst [vmem:[%s9] sm:$0xf] %v1015
    // Predicated region
    $region46: #{timeseries_cnn_forward.1} parent=1 // pred_check
      _
    $region47: #{timeseries_cnn_forward.1} parent=1 // pred_check_branch
      %1018 = sbr.rel (0) target = $region49
    $region48: #{timeseries_cnn_forward.1} parent=1 // pred_region
      _
    $region49: #{timeseries_cnn_forward.1} parent=1 // pred_fallthru
      _
    // Predicated region
    $region50: #{timeseries_cnn_forward.1} parent=1 // pred_check
      _
    $region51: #{timeseries_cnn_forward.1} parent=1 // pred_check_branch
      %1020 = sbr.rel (0) target = $region53
    $region52: #{timeseries_cnn_forward.1} parent=1 // pred_region
      _
    $region53: #{timeseries_cnn_forward.1} parent=1 // pred_fallthru
      _
    %1021 = vsyncpa [#allocation3], 1
    %1022 = vsyncpa [#allocation5], 1

</llo_original>
